<compile_context>
chip_gen: v5e
topology: v5e:2x2
jax: 0.10.0
libtpu: 0.0.40
codegen_flags: <defaults>
</compile_context>

<pallas_src>
import functools
import math

import jax
import jax.numpy as jnp
from jax.experimental import pallas as pl
from jax.experimental.pallas import tpu as pltpu


def strtobool(s):
    return str(s).strip().lower() in ("true", "1", "yes", "y", "t")


# ----------------------------------------------------------------------------
# Activations (plain jnp -> usable both inside the Pallas kernel and host-side)
# ----------------------------------------------------------------------------
def _apply_act(y, act):
    if act == "relu":
        return jnp.maximum(y, 0.0)
    if act == "tanh":
        return jnp.tanh(y)
    if act == "sigmoid":
        return jax.nn.sigmoid(y)
    if act == "leaky_relu":
        return jnp.where(y >= 0, y, 0.2 * y)
    if act == "hardtanh":
        return jnp.clip(y, -1.0, 1.0)
    if act == "elu":
        return jnp.where(y >= 0, y, jnp.exp(y) - 1.0)
    if act == "softmax":  # nn.LogSoftmax(dim=1) on (N, D) == last axis here
        return jax.nn.log_softmax(y, axis=-1)
    if act == "linear":   # LeakyReLU(1) == identity
        return y
    # TODO(synk): 'prelu' has a learnable slope parameter; not supported here.
    raise NotImplementedError(f"activation {act}")


# ----------------------------------------------------------------------------
# Hamilton-product weight assembly (done ONCE, outside the kernel)
#   cat([cat([r,-i,-j,-k],0), cat([i,r,-k,j],0),
#        cat([j,k,r,-i],0),   cat([k,-j,i,r],0)], 1)
# ----------------------------------------------------------------------------
def assemble_quaternion_weight(wr, wi, wj, wk):
    return jnp.concatenate(
        [
            jnp.concatenate([wr,  wi,  wj,  wk], axis=1),
            jnp.concatenate([-wi, wr,  wk, -wj], axis=1),
            jnp.concatenate([-wj, -wk, wr,  wi], axis=1),
            jnp.concatenate([-wk, wj, -wi,  wr], axis=1),
        ],
        axis=0,
    )


# ----------------------------------------------------------------------------
# Fused multi-layer QMLP kernel: for each row tile, run ALL layers back-to-back.
# Weights/biases are grid-invariant whole-array blocks resident in VMEM; the
# intermediate activations never leave the chip.
# ----------------------------------------------------------------------------
def _fused_qmlp_kernel(x_ref, *refs, acts):
    o_ref = refs[-1]
    wb_refs = refs[:-1]  # alternating (w_bf16, b_f32) per layer

    # f32 -> bf16 cast happens here (VPU) instead of a separate HBM pass.
    h = x_ref[...].astype(jnp.bfloat16)  # (tm, Din)
    n_layers = len(acts)
    for li in range(n_layers):
        w = wb_refs[2 * li][...]        # (Din_l, Dout_l) bf16
        b = wb_refs[2 * li + 1][...]    # (1, Dout_l) f32
        # MXU matmul in bf16 with f32 accumulation; bias + activation in f32.
        y = jnp.dot(h, w, preferred_element_type=jnp.float32) + b
        y = _apply_act(y, acts[li])
        if li + 1 < n_layers:
            h = y.astype(jnp.bfloat16)  # feed next MXU matmul in bf16
        else:
            h = y                       # final layer stays f32
    o_ref[...] = h.astype(o_ref.dtype)


def _choose_row_tile(n):
    # Single grid step unless there is enough work per step to amortize the
    # ~0.35 us per-step pipeline overhead (and to make a 2nd TensorCore on
    # v7x worthwhile).  Block == full array dim is always layout-legal.
    if n <= 1024:
        return n
    # 16/128-aligned tile; ~85% of HBM roofline per measured tiling sweep.
    # grid = cdiv(n, 512): the last (partial) block is masked by Pallas.
    return 512


def fused_qmlp_forward(x, layers, acts):
    """layers: list of (w_bf16 (Din_l, Dout_l), b_f32 (1, Dout_l)) per layer."""
    N, Din = x.shape
    assert layers[0][0].shape[0] == Din
    Dout_last = layers[-1][0].shape[1]

    tm = _choose_row_tile(N)
    grid = (pl.cdiv(N, tm),)

    in_specs = [pl.BlockSpec((tm, Din), lambda i: (i, 0))]
    flat_args = [x]  # kept f32; cast to bf16 inside the kernel
    flops = 0
    transcendentals = 0
    bytes_accessed = N * Din * 4 + N * Dout_last * 4
    for (w, b), act in zip(layers, acts):
        din_l, dout_l = w.shape
        in_specs.append(pl.BlockSpec((din_l, dout_l), lambda i: (0, 0)))
        in_specs.append(pl.BlockSpec((1, dout_l), lambda i: (0, 0)))
        flat_args.append(w)
        flat_args.append(b)
        flops += 2 * N * din_l * dout_l
        bytes_accessed += din_l * dout_l * 2 + dout_l * 4
        if act in ("tanh", "sigmoid", "elu", "softmax"):
            transcendentals += N * dout_l

    # VMEM footprint is tiny at these widths (<1 MiB even double-buffered with
    # tm=512), so the default scoped-VMEM limit is fine on v5e/v6e/v7x.
    kernel = functools.partial(_fused_qmlp_kernel, acts=tuple(acts))
    return pl.pallas_call(
        kernel,
        out_shape=jax.ShapeDtypeStruct((N, Dout_last), jnp.float32),
        grid=grid,
        in_specs=in_specs,
        out_specs=pl.BlockSpec((tm, Dout_last), lambda i: (i, 0)),
        compiler_params=pltpu.CompilerParams(
            dimension_semantics=("parallel",),
        ),
        cost_estimate=pl.CostEstimate(
            flops=flops,
            transcendentals=transcendentals,
            bytes_accessed=bytes_accessed,
        ),
    )(*flat_args)


# ----------------------------------------------------------------------------
# QMLP module (parameters built deterministically in-script)
# ----------------------------------------------------------------------------
class QMLPPallas:
    def __init__(self, options, inp_dim, key):
        self.input_dim = inp_dim
        self.dnn_lay = list(map(int, options["dnn_lay"].split(",")))
        self.dnn_drop = list(map(float, options["dnn_drop"].split(",")))
        self.dnn_act = options["dnn_act"].split(",")
        self.proj = strtobool(options["proj_layer"])
        self.quaternion_norm = strtobool(options["quaternion_norm"])
        # TODO(synk): proj_layer (nn.Linear + tanh), q_normalize and dropout with
        # p>0 (train mode) are disabled in this synthetic config.
        assert not self.proj and not self.quaternion_norm
        assert all(p == 0.0 for p in self.dnn_drop)

        current = inp_dim
        self.params = []        # quaternion components (for f32 reference)
        self.fused_params = []  # pre-assembled bf16 weight + (1, Dout) f32 bias
        for out_dim in self.dnn_lay:
            assert current % 4 == 0 and out_dim % 4 == 0
            in_q, out_q = current // 4, out_dim // 4
            key, k1, k2, k3, k4 = jax.random.split(key, 5)
            # Deterministic glorot-style init (quaternion chi-dist init omitted;
            # synthetic weights, not a checkpoint).
            scale = 1.0 / math.sqrt(2.0 * (in_q + out_q))
            wr = scale * jax.random.normal(k1, (in_q, out_q), jnp.float32)
            wi = scale * jax.random.normal(k2, (in_q, out_q), jnp.float32)
            wj = scale * jax.random.normal(k3, (in_q, out_q), jnp.float32)
            wk = scale * jax.random.normal(k4, (in_q, out_q), jnp.float32)
            b = jnp.zeros((out_dim,), jnp.float32)
            self.params.append((wr, wi, wj, wk, b))
            # Hoisted one-time Hamilton-product weight assembly + dtype prep.
            w_full = assemble_quaternion_weight(wr, wi, wj, wk)
            self.fused_params.append(
                (w_full.astype(jnp.bfloat16), b.reshape(1, out_dim).astype(jnp.float32))
            )
            current = out_dim
        self.out_dim = current

        # jit the whole forward: the single pallas_call is the only device op.
        self._jit_forward = jax.jit(
            functools.partial(fused_qmlp_forward, acts=tuple(self.dnn_act))
        )

    def forward(self, x):
        # Single fused Pallas kernel over all layers (dropout p=0 -> identity).
        return self._jit_forward(x, self.fused_params)

    # pure-JAX reference, exact f32 (module semantics)
    def forward_ref(self, x):
        for (wr, wi, wj, wk, b), act in zip(self.params, self.dnn_act):
            w = assemble_quaternion_weight(wr, wi, wj, wk)
            x = _apply_act(x @ w + b, act)
        return x

    # pure-JAX reference matching the kernel's bf16-matmul numerics
    def forward_ref_bf16(self, x):
        h = x.astype(jnp.bfloat16)
        y = None
        n = len(self.fused_params)
        for li, ((w, b), act) in enumerate(zip(self.fused_params, self.dnn_act)):
            y = jnp.dot(h, w, preferred_element_type=jnp.float32) + b
            y = _apply_act(y, act)
            if li + 1 < n:
                h = y.astype(jnp.bfloat16)
        return y


if __name__ == "__main__":
    options = {
        "dnn_lay": "64,32",
        "dnn_drop": "0.0,0.0",
        "dnn_act": "relu,tanh",
        "quaternion_init": "glorot",
        "autograd": "True",
        "proj_layer": "False",
        "proj_dim": "0",
        "proj_norm": "False",
        "quaternion_norm": "False",
    }
    key = jax.random.PRNGKey(0)
    key, xkey = jax.random.split(key)

    inp_dim = 32     # quaternion input: 4 * 8
    batch = 256      # -> single grid step (overhead-bound regime)
    x = jax.random.normal(xkey, (batch, inp_dim), jnp.float32)

    model = QMLPPallas(options, inp_dim, key)

    out = jax.block_until_ready(model.forward(x))
    assert out.shape == (batch, model.out_dim)

    # Tight check against a reference with identical bf16-matmul numerics.
    ref_bf16 = model.forward_ref_bf16(x)
    assert jnp.allclose(out, ref_bf16, atol=1e-4, rtol=1e-4), (
        float(jnp.max(jnp.abs(out - ref_bf16)))
    )

    # Looser check against the exact f32 module semantics.
    ref_f32 = model.forward_ref(x)
    assert jnp.allclose(out, ref_f32, atol=5e-2, rtol=5e-2), (
        float(jnp.max(jnp.abs(out - ref_f32)))
    )

    # Exercise the large-N path: grid > 1 with a masked partial last block
    # (1100 rows -> tm=512, grid=(3,), no jnp.pad / output slice needed).
    key, xkey2 = jax.random.split(key)
    x2 = jax.random.normal(xkey2, (1100, inp_dim), jnp.float32)
    out2 = jax.block_until_ready(model.forward(x2))
    assert out2.shape == (1100, model.out_dim)
    ref2 = model.forward_ref_bf16(x2)
    assert jnp.allclose(out2, ref2, atol=1e-4, rtol=1e-4), (
        float(jnp.max(jnp.abs(out2 - ref2)))
    )

    print("KERNEL_OK")
</pallas_src>

<mosaic_0001>
module attributes {stable_mosaic.version = 11 : i64} {
  func.func @_fused_qmlp_kernel(%arg0: i32, %arg1: memref<256x32xf32, #tpu.memory_space<vmem>>, %arg2: memref<32x64xbf16, #tpu.memory_space<vmem>>, %arg3: memref<1x64xf32, #tpu.memory_space<vmem>>, %arg4: memref<64x32xbf16, #tpu.memory_space<vmem>>, %arg5: memref<1x32xf32, #tpu.memory_space<vmem>>, %arg6: memref<256x32xf32, #tpu.memory_space<vmem>>) attributes {dimension_semantics = [#tpu.dimension_semantics<parallel>], iteration_bounds = array<i64: 1>, scalar_prefetch = 0 : i64, scratch_operands = 0 : i64, tpu.core_type = #tpu.core_type<tc>, window_params = [{transform_indices = @transform_0, window_bounds = array<i64: 256, 32>}, {pipeline_mode = #tpu.pipeline_mode<synchronous>, transform_indices = @transform_1, window_bounds = array<i64: 32, 64>}, {pipeline_mode = #tpu.pipeline_mode<synchronous>, transform_indices = @transform_2, window_bounds = array<i64: 1, 64>}, {pipeline_mode = #tpu.pipeline_mode<synchronous>, transform_indices = @transform_3, window_bounds = array<i64: 64, 32>}, {pipeline_mode = #tpu.pipeline_mode<synchronous>, transform_indices = @transform_4, window_bounds = array<i64: 1, 32>}, {transform_indices = @transform_5, window_bounds = array<i64: 256, 32>}]} {
    %c0 = arith.constant 0 : index
    %c0_0 = arith.constant 0 : index
    %0 = vector.load %arg1[%c0, %c0_0] : memref<256x32xf32, #tpu.memory_space<vmem>>, vector<256x32xf32>
    %1 = arith.truncf %0 : vector<256x32xf32> to vector<256x32xbf16>
    %c0_1 = arith.constant 0 : index
    %c0_2 = arith.constant 0 : index
    %2 = vector.load %arg2[%c0_1, %c0_2] : memref<32x64xbf16, #tpu.memory_space<vmem>>, vector<32x64xbf16>
    %c0_3 = arith.constant 0 : index
    %c0_4 = arith.constant 0 : index
    %3 = vector.load %arg3[%c0_3, %c0_4] : memref<1x64xf32, #tpu.memory_space<vmem>>, vector<1x64xf32>
    %cst = arith.constant dense<0.000000e+00> : vector<256x64xf32>
    %4 = tpu.matmul %1, %2, %cst {dimension_numbers = #tpu.dot_dimension_numbers<[1], [0], [0], [1], [0, 0, 1, 1], [], []>} : vector<256x32xbf16>, vector<32x64xbf16>, vector<256x64xf32> -> vector<256x64xf32>
    %5 = vector.broadcast %3 : vector<1x64xf32> to vector<256x64xf32>
    %6 = arith.addf %4, %5 : vector<256x64xf32>
    %cst_5 = arith.constant 0.000000e+00 : f32
    %7 = vector.broadcast %cst_5 : f32 to vector<256x64xf32>
    %8 = arith.maximumf %6, %7 : vector<256x64xf32>
    %9 = arith.truncf %8 : vector<256x64xf32> to vector<256x64xbf16>
    %c0_6 = arith.constant 0 : index
    %c0_7 = arith.constant 0 : index
    %10 = vector.load %arg4[%c0_6, %c0_7] : memref<64x32xbf16, #tpu.memory_space<vmem>>, vector<64x32xbf16>
    %c0_8 = arith.constant 0 : index
    %c0_9 = arith.constant 0 : index
    %11 = vector.load %arg5[%c0_8, %c0_9] : memref<1x32xf32, #tpu.memory_space<vmem>>, vector<1x32xf32>
    %cst_10 = arith.constant dense<0.000000e+00> : vector<256x32xf32>
    %12 = tpu.matmul %9, %10, %cst_10 {dimension_numbers = #tpu.dot_dimension_numbers<[1], [0], [0], [1], [0, 0, 1, 1], [], []>} : vector<256x64xbf16>, vector<64x32xbf16>, vector<256x32xf32> -> vector<256x32xf32>
    %13 = vector.broadcast %11 : vector<1x32xf32> to vector<256x32xf32>
    %14 = arith.addf %12, %13 : vector<256x32xf32>
    %15 = math.tanh %14 : vector<256x32xf32>
    %c0_11 = arith.constant 0 : index
    %c0_12 = arith.constant 0 : index
    %16 = vector.load %arg6[%c0_11, %c0_12] : memref<256x32xf32, #tpu.memory_space<vmem>>, vector<256x32xf32>
    tpu.vector_store %arg6[%c0_11, %c0_12], %15 {strides = array<i32>} : memref<256x32xf32, #tpu.memory_space<vmem>>, vector<256x32xf32>,
    return
  }
  func.func @transform_0(%arg0: i32) -> (i32, i32) {
    %c0_i32 = arith.constant 0 : i32
    %c0_i32_0 = arith.constant 0 : i32
    return %arg0, %c0_i32 : i32, i32
  }
  func.func @transform_1(%arg0: i32) -> (i32, i32) {
    %c0_i32 = arith.constant 0 : i32
    %c0_i32_0 = arith.constant 0 : i32
    %c0_i32_1 = arith.constant 0 : i32
    return %c0_i32, %c0_i32_0 : i32, i32
  }
  func.func @transform_2(%arg0: i32) -> (i32, i32) {
    %c0_i32 = arith.constant 0 : i32
    %c0_i32_0 = arith.constant 0 : i32
    %c0_i32_1 = arith.constant 0 : i32
    return %c0_i32, %c0_i32_0 : i32, i32
  }
  func.func @transform_3(%arg0: i32) -> (i32, i32) {
    %c0_i32 = arith.constant 0 : i32
    %c0_i32_0 = arith.constant 0 : i32
    %c0_i32_1 = arith.constant 0 : i32
    return %c0_i32, %c0_i32_0 : i32, i32
  }
  func.func @transform_4(%arg0: i32) -> (i32, i32) {
    %c0_i32 = arith.constant 0 : i32
    %c0_i32_0 = arith.constant 0 : i32
    %c0_i32_1 = arith.constant 0 : i32
    return %c0_i32, %c0_i32_0 : i32, i32
  }
  func.func @transform_5(%arg0: i32) -> (i32, i32) {
    %c0_i32 = arith.constant 0 : i32
    %c0_i32_0 = arith.constant 0 : i32
    return %arg0, %c0_i32 : i32, i32
  }
}

</mosaic_0001>

<llo_original>
// kernel: fused_qmlp_forward.1
$region0: #{fused_qmlp_forward.1}
  #allocation0 [shape = 'u32[]', space=smem, size = 0x4, offset = 0x4, fixed_abs, tag = 'smem constant byte address 0x4 - core index']
  #allocation1 [shape = 'u32[72,128]{1,0:T(1,128)}', space=vmem, size = 0x9000, scoped, tag = 'internal scratch']
  %s0 = inlined_call_operand.vmem [shape: f32[256,32], index: 0, kind: input, shape index: {}]
  %s1 = inlined_call_operand.vmem [shape: bf16[32,64], index: 1, kind: input, shape index: {}]
  %s2 = inlined_call_operand.vmem [shape: f32[1,64], index: 2, kind: input, shape index: {}]
  %s3 = inlined_call_operand.vmem [shape: bf16[64,32], index: 3, kind: input, shape index: {}]
  %s4 = inlined_call_operand.vmem [shape: f32[1,32], index: 4, kind: input, shape index: {}]
  %s5 = inlined_call_operand.vmem [shape: f32[256,32], index: 5, kind: output, shape index: {}]
  %s6 = sld [smem:[#allocation0]]
  $region30: #{fused_qmlp_forward.1} parent=0
    _
  %s8 = ssub.s32 1, %s6
  %s9 = scalar_select 0, %s8, %s6
  // Predicated region
  $region2: #{fused_qmlp_forward.1} parent=0 // pred_check
    _
  $region3: #{fused_qmlp_forward.1} parent=0 // pred_check_branch
    %11 = sbr.rel (0) target = $region5
  $region4: #{fused_qmlp_forward.1} parent=0 // pred_region
    _
  $region5: #{fused_qmlp_forward.1} parent=0 // pred_fallthru
    _
  // Predicated region
  $region6: #{fused_qmlp_forward.1} parent=0 // pred_check
    _
  $region7: #{fused_qmlp_forward.1} parent=0 // pred_check_branch
    %13 = sbr.rel (0) target = $region9
  $region8: #{fused_qmlp_forward.1} parent=0 // pred_region
    _
  $region9: #{fused_qmlp_forward.1} parent=0 // pred_fallthru
    _
  // Predicated region
  $region10: #{fused_qmlp_forward.1} parent=0 // pred_check
    _
  $region11: #{fused_qmlp_forward.1} parent=0 // pred_check_branch
    %15 = sbr.rel (0) target = $region13
  $region12: #{fused_qmlp_forward.1} parent=0 // pred_region
    _
  $region13: #{fused_qmlp_forward.1} parent=0 // pred_fallthru
    _
  // Predicated region
  $region14: #{fused_qmlp_forward.1} parent=0 // pred_check
    _
  $region15: #{fused_qmlp_forward.1} parent=0 // pred_check_branch
    %17 = sbr.rel (0) target = $region17
  $region16: #{fused_qmlp_forward.1} parent=0 // pred_region
    _
  $region17: #{fused_qmlp_forward.1} parent=0 // pred_fallthru
    _
  // Predicated region
  $region18: #{fused_qmlp_forward.1} parent=0 // pred_check
    _
  $region19: #{fused_qmlp_forward.1} parent=0 // pred_check_branch
    %19 = sbr.rel (0) target = $region21
  $region20: #{fused_qmlp_forward.1} parent=0 // pred_region
    _
  $region21: #{fused_qmlp_forward.1} parent=0 // pred_fallthru
    _
  %v21 = vld [vmem:[%s0] sm:$0xff]
  %v22 = vld [vmem:[%s0 + $0x8] sm:$0xff]
  %v23 = vld [vmem:[%s0 + $0x10] sm:$0xff]
  %v24 = vld [vmem:[%s0 + $0x18] sm:$0xff]
  %v25 = vld [vmem:[%s0 + $0x20] sm:$0xff]
  %v26 = vld [vmem:[%s0 + $0x28] sm:$0xff]
  %v27 = vld [vmem:[%s0 + $0x30] sm:$0xff]
  %v28 = vld [vmem:[%s0 + $0x38] sm:$0xff]
  %v29 = vld [vmem:[%s0 + $0x40] sm:$0xff]
  %v30 = vld [vmem:[%s0 + $0x48] sm:$0xff]
  %v31 = vld [vmem:[%s0 + $0x50] sm:$0xff]
  %v32 = vld [vmem:[%s0 + $0x58] sm:$0xff]
  %v33 = vld [vmem:[%s0 + $0x60] sm:$0xff]
  %v34 = vld [vmem:[%s0 + $0x68] sm:$0xff]
  %v35 = vld [vmem:[%s0 + $0x70] sm:$0xff]
  %v36 = vld [vmem:[%s0 + $0x78] sm:$0xff]
  %v37 = vld [vmem:[%s0 + $0x80] sm:$0xff]
  %v38 = vld [vmem:[%s0 + $0x88] sm:$0xff]
  %v39 = vld [vmem:[%s0 + $0x90] sm:$0xff]
  %v40 = vld [vmem:[%s0 + $0x98] sm:$0xff]
  %v41 = vld [vmem:[%s0 + $0xa0] sm:$0xff]
  %v42 = vld [vmem:[%s0 + $0xa8] sm:$0xff]
  %v43 = vld [vmem:[%s0 + $0xb0] sm:$0xff]
  %v44 = vld [vmem:[%s0 + $0xb8] sm:$0xff]
  %v45 = vld [vmem:[%s0 + $0xc0] sm:$0xff]
  %v46 = vld [vmem:[%s0 + $0xc8] sm:$0xff]
  %v47 = vld [vmem:[%s0 + $0xd0] sm:$0xff]
  %v48 = vld [vmem:[%s0 + $0xd8] sm:$0xff]
  %v49 = vld [vmem:[%s0 + $0xe0] sm:$0xff]
  %v50 = vld [vmem:[%s0 + $0xe8] sm:$0xff]
  %v51 = vld [vmem:[%s0 + $0xf0] sm:$0xff]
  %v52 = vld [vmem:[%s0 + $0xf8] sm:$0xff]
  %v53 = vpack.c.bf16 %v22, %v21
  %v54 = vpack.c.bf16 %v24, %v23
  %v55 = vpack.c.bf16 %v26, %v25
  %v56 = vpack.c.bf16 %v28, %v27
  %v57 = vpack.c.bf16 %v30, %v29
  %v58 = vpack.c.bf16 %v32, %v31
  %v59 = vpack.c.bf16 %v34, %v33
  %v60 = vpack.c.bf16 %v36, %v35
  %v61 = vpack.c.bf16 %v38, %v37
  %v62 = vpack.c.bf16 %v40, %v39
  %v63 = vpack.c.bf16 %v42, %v41
  %v64 = vpack.c.bf16 %v44, %v43
  %v65 = vpack.c.bf16 %v46, %v45
  %v66 = vpack.c.bf16 %v48, %v47
  %v67 = vpack.c.bf16 %v50, %v49
  %v68 = vpack.c.bf16 %v52, %v51
  %v69 = vld [vmem:[%s1] sm:$0xf]
  %v70 = vld [vmem:[%s1 + $0x4] sm:$0xf]
  %v71 = vld [vmem:[%s1 + $0x8] sm:$0xf]
  %v72 = vld [vmem:[%s1 + $0xc] sm:$0xf]
  %v73 = vld [vmem:[%s2] sm:$0x1]
  %v75 = vperm.slane %v73, 0
  %v81 = vunpack.c.l.b16 %v69
  %v82 = vunpack.c.l.b16 %v70
  %v83 = vunpack.c.l.b16 %v71
  %v84 = vunpack.c.l.b16 %v72
  %v85 = vpack.c.b16 %v82, %v81
  %v86 = vpack.c.b16 %v84, %v83
  %vm89 = vcmask 261120
  %v91 = vsel %vm89, %v53, 0
  %v94 = vsel %vm89, %v54, 0
  %v97 = vsel %vm89, %v55, 0
  %v100 = vsel %vm89, %v56, 0
  %v103 = vsel %vm89, %v57, 0
  %v106 = vsel %vm89, %v58, 0
  %v109 = vsel %vm89, %v59, 0
  %v112 = vsel %vm89, %v60, 0
  %v115 = vsel %vm89, %v61, 0
  %v118 = vsel %vm89, %v62, 0
  %v121 = vsel %vm89, %v63, 0
  %v124 = vsel %vm89, %v64, 0
  %v127 = vsel %vm89, %v65, 0
  %v130 = vsel %vm89, %v66, 0
  %v133 = vsel %vm89, %v67, 0
  %v136 = vsel %vm89, %v68, 0
  %138 = vmatpush.bf16.msra.mxu0 0
  %139 = vmatpush.bf16.msra.mxu0 0
  %140 = vmatpush.bf16.msra.mxu0 0
  %141 = vmatpush.bf16.msra.mxu0 0
  %142 = vmatpush.bf16.msra.mxu0 0
  %143 = vmatpush.bf16.msra.mxu0 0
  %144 = vmatpush.bf16.msra.mxu0 %v86
  %145 = vmatpush.bf16.msra.mxu0 %v85
  %146 = vmatmul.bf16.gmra.mxu0 %v91
  %v147 = vpop.f32.mrf.mxu0
  %v148 = vadd.f32 %v75, %v147
  %v149 = vpop.f32.mrf.mxu0
  %v150 = vadd.f32 %v75, %v149
  %151 = vmatmul.bf16.gmra.mxu0 %v94
  %v152 = vpop.f32.mrf.mxu0
  %v153 = vadd.f32 %v75, %v152
  %v154 = vpop.f32.mrf.mxu0
  %v155 = vadd.f32 %v75, %v154
  %156 = vmatmul.bf16.gmra.mxu0 %v97
  %v157 = vpop.f32.mrf.mxu0
  %v158 = vadd.f32 %v75, %v157
  %v159 = vpop.f32.mrf.mxu0
  %v160 = vadd.f32 %v75, %v159
  %161 = vmatmul.bf16.gmra.mxu0 %v100
  %v162 = vpop.f32.mrf.mxu0
  %v163 = vadd.f32 %v75, %v162
  %v164 = vpop.f32.mrf.mxu0
  %v165 = vadd.f32 %v75, %v164
  %166 = vmatmul.bf16.gmra.mxu0 %v103
  %v167 = vpop.f32.mrf.mxu0
  %v168 = vadd.f32 %v75, %v167
  %v169 = vpop.f32.mrf.mxu0
  %v170 = vadd.f32 %v75, %v169
  %171 = vmatmul.bf16.gmra.mxu0 %v106
  %v172 = vpop.f32.mrf.mxu0
  %v173 = vadd.f32 %v75, %v172
  %v174 = vpop.f32.mrf.mxu0
  %v175 = vadd.f32 %v75, %v174
  %176 = vmatmul.bf16.gmra.mxu0 %v109
  %v177 = vpop.f32.mrf.mxu0
  %v178 = vadd.f32 %v75, %v177
  %v179 = vpop.f32.mrf.mxu0
  %v180 = vadd.f32 %v75, %v179
  %181 = vmatmul.bf16.gmra.mxu0 %v112
  %v182 = vpop.f32.mrf.mxu0
  %v183 = vadd.f32 %v75, %v182
  %v184 = vpop.f32.mrf.mxu0
  %v185 = vadd.f32 %v75, %v184
  %186 = vmatmul.bf16.gmra.mxu0 %v115
  %v187 = vpop.f32.mrf.mxu0
  %v188 = vadd.f32 %v75, %v187
  %v189 = vpop.f32.mrf.mxu0
  %v190 = vadd.f32 %v75, %v189
  %191 = vmatmul.bf16.gmra.mxu0 %v118
  %v192 = vpop.f32.mrf.mxu0
  %v193 = vadd.f32 %v75, %v192
  %v194 = vpop.f32.mrf.mxu0
  %v195 = vadd.f32 %v75, %v194
  %196 = vmatmul.bf16.gmra.mxu0 %v121
  %v197 = vpop.f32.mrf.mxu0
  %v198 = vadd.f32 %v75, %v197
  %v199 = vpop.f32.mrf.mxu0
  %v200 = vadd.f32 %v75, %v199
  %201 = vmatmul.bf16.gmra.mxu0 %v124
  %v202 = vpop.f32.mrf.mxu0
  %v203 = vadd.f32 %v75, %v202
  %v204 = vpop.f32.mrf.mxu0
  %v205 = vadd.f32 %v75, %v204
  %206 = vmatmul.bf16.gmra.mxu0 %v127
  %v207 = vpop.f32.mrf.mxu0
  %v208 = vadd.f32 %v75, %v207
  %v209 = vpop.f32.mrf.mxu0
  %v210 = vadd.f32 %v75, %v209
  %211 = vmatmul.bf16.gmra.mxu0 %v130
  %v212 = vpop.f32.mrf.mxu0
  %v213 = vadd.f32 %v75, %v212
  %v214 = vpop.f32.mrf.mxu0
  %v215 = vadd.f32 %v75, %v214
  %216 = vmatmul.bf16.gmra.mxu0 %v133
  %v217 = vpop.f32.mrf.mxu0
  %v218 = vadd.f32 %v75, %v217
  %v219 = vpop.f32.mrf.mxu0
  %v220 = vadd.f32 %v75, %v219
  %221 = vmatmul.bf16.gmra.mxu0 %v136
  %v222 = vpop.f32.mrf.mxu0
  %v223 = vadd.f32 %v75, %v222
  %v224 = vpop.f32.mrf.mxu0
  %v225 = vadd.f32 %v75, %v224
  %226 = vdwg.mxu0
  %v227 = vmax.f32 %v148, 0.0
  %v228 = vmax.f32 %v150, 0.0
  %v229 = vmax.f32 %v153, 0.0
  %v230 = vmax.f32 %v155, 0.0
  %v231 = vmax.f32 %v158, 0.0
  %v232 = vmax.f32 %v160, 0.0
  %v233 = vmax.f32 %v163, 0.0
  %v234 = vmax.f32 %v165, 0.0
  %v235 = vmax.f32 %v168, 0.0
  %v236 = vmax.f32 %v170, 0.0
  %v237 = vmax.f32 %v173, 0.0
  %v238 = vmax.f32 %v175, 0.0
  %v239 = vmax.f32 %v178, 0.0
  %v240 = vmax.f32 %v180, 0.0
  %v241 = vmax.f32 %v183, 0.0
  %v242 = vmax.f32 %v185, 0.0
  %v243 = vmax.f32 %v188, 0.0
  %v244 = vmax.f32 %v190, 0.0
  %v245 = vmax.f32 %v193, 0.0
  %v246 = vmax.f32 %v195, 0.0
  %v247 = vmax.f32 %v198, 0.0
  %v248 = vmax.f32 %v200, 0.0
  %v249 = vmax.f32 %v203, 0.0
  %v250 = vmax.f32 %v205, 0.0
  %v251 = vmax.f32 %v208, 0.0
  %v252 = vmax.f32 %v210, 0.0
  %v253 = vmax.f32 %v213, 0.0
  %v254 = vmax.f32 %v215, 0.0
  %v255 = vmax.f32 %v218, 0.0
  %v256 = vmax.f32 %v220, 0.0
  %v257 = vmax.f32 %v223, 0.0
  %v258 = vmax.f32 %v225, 0.0
  %v259 = vpack.c.bf16 %v228, %v227
  %v260 = vpack.c.bf16 %v230, %v229
  %v261 = vpack.c.bf16 %v232, %v231
  %v262 = vpack.c.bf16 %v234, %v233
  %v263 = vpack.c.bf16 %v236, %v235
  %v264 = vpack.c.bf16 %v238, %v237
  %v265 = vpack.c.bf16 %v240, %v239
  %v266 = vpack.c.bf16 %v242, %v241
  %v267 = vpack.c.bf16 %v244, %v243
  %v268 = vpack.c.bf16 %v246, %v245
  %v269 = vpack.c.bf16 %v248, %v247
  %v270 = vpack.c.bf16 %v250, %v249
  %v271 = vpack.c.bf16 %v252, %v251
  %v272 = vpack.c.bf16 %v254, %v253
  %v273 = vpack.c.bf16 %v256, %v255
  %v274 = vpack.c.bf16 %v258, %v257
  %v275 = vld [vmem:[%s3] sm:$0xf]
  %v276 = vld [vmem:[%s3 + $0x4] sm:$0xf]
  %v277 = vld [vmem:[%s3 + $0x8] sm:$0xf]
  %v278 = vld [vmem:[%s3 + $0xc] sm:$0xf]
  %v279 = vld [vmem:[%s3 + $0x10] sm:$0xf]
  %v280 = vld [vmem:[%s3 + $0x14] sm:$0xf]
  %v281 = vld [vmem:[%s3 + $0x18] sm:$0xf]
  %v282 = vld [vmem:[%s3 + $0x1c] sm:$0xf]
  %v283 = vld [vmem:[%s4] sm:$0x1]
  %v285 = vperm.slane %v283, 0
  %v295 = vunpack.c.l.b16 %v275
  %v296 = vunpack.c.l.b16 %v276
  %v297 = vunpack.c.l.b16 %v277
  %v298 = vunpack.c.l.b16 %v278
  %v299 = vunpack.c.l.b16 %v279
  %v300 = vunpack.c.l.b16 %v280
  %v301 = vunpack.c.l.b16 %v281
  %v302 = vunpack.c.l.b16 %v282
  %v303 = vpack.c.b16 %v296, %v295
  %v304 = vpack.c.b16 %v298, %v297
  %v305 = vpack.c.b16 %v300, %v299
  %v306 = vpack.c.b16 %v302, %v301
  %vm311 = vcmask 523264
  %v313 = vsel %vm311, %v259, 0
  %v316 = vsel %vm311, %v260, 0
  %v319 = vsel %vm311, %v261, 0
  %v322 = vsel %vm311, %v262, 0
  %v325 = vsel %vm311, %v263, 0
  %v328 = vsel %vm311, %v264, 0
  %v331 = vsel %vm311, %v265, 0
  %v334 = vsel %vm311, %v266, 0
  %v337 = vsel %vm311, %v267, 0
  %v340 = vsel %vm311, %v268, 0
  %v343 = vsel %vm311, %v269, 0
  %v346 = vsel %vm311, %v270, 0
  %v349 = vsel %vm311, %v271, 0
  %v352 = vsel %vm311, %v272, 0
  %v355 = vsel %vm311, %v273, 0
  %v358 = vsel %vm311, %v274, 0
  %360 = vmatpush.bf16.msra.mxu0 0
  %361 = vmatpush.bf16.msra.mxu0 0
  %362 = vmatpush.bf16.msra.mxu0 0
  %363 = vmatpush.bf16.msra.mxu0 0
  %364 = vmatpush.bf16.msra.mxu0 %v306
  %365 = vmatpush.bf16.msra.mxu0 %v305
  %366 = vmatpush.bf16.msra.mxu0 %v304
  %367 = vmatpush.bf16.msra.mxu0 %v303
  %368 = vmatmul.bf16.gmra.mxu0 %v313
  %v369 = vpop.f32.mrf.mxu0
  %v370 = vadd.f32 %v285, %v369
  %v371 = vpop.f32.mrf.mxu0
  %v372 = vadd.f32 %v285, %v371
  %373 = vmatmul.bf16.gmra.mxu0 %v316
  %v374 = vpop.f32.mrf.mxu0
  %v375 = vadd.f32 %v285, %v374
  %v376 = vpop.f32.mrf.mxu0
  %v377 = vadd.f32 %v285, %v376
  %378 = vmatmul.bf16.gmra.mxu0 %v319
  %v379 = vpop.f32.mrf.mxu0
  %v380 = vadd.f32 %v285, %v379
  %v381 = vpop.f32.mrf.mxu0
  %v382 = vadd.f32 %v285, %v381
  %383 = vmatmul.bf16.gmra.mxu0 %v322
  %v384 = vpop.f32.mrf.mxu0
  %v385 = vadd.f32 %v285, %v384
  %v386 = vpop.f32.mrf.mxu0
  %v387 = vadd.f32 %v285, %v386
  %388 = vmatmul.bf16.gmra.mxu0 %v325
  %v389 = vpop.f32.mrf.mxu0
  %v390 = vadd.f32 %v285, %v389
  %v391 = vpop.f32.mrf.mxu0
  %v392 = vadd.f32 %v285, %v391
  %393 = vmatmul.bf16.gmra.mxu0 %v328
  %v394 = vpop.f32.mrf.mxu0
  %v395 = vadd.f32 %v285, %v394
  %v396 = vpop.f32.mrf.mxu0
  %v397 = vadd.f32 %v285, %v396
  %398 = vmatmul.bf16.gmra.mxu0 %v331
  %v399 = vpop.f32.mrf.mxu0
  %v400 = vadd.f32 %v285, %v399
  %v401 = vpop.f32.mrf.mxu0
  %v402 = vadd.f32 %v285, %v401
  %403 = vmatmul.bf16.gmra.mxu0 %v334
  %v404 = vpop.f32.mrf.mxu0
  %v405 = vadd.f32 %v285, %v404
  %v406 = vpop.f32.mrf.mxu0
  %v407 = vadd.f32 %v285, %v406
  %408 = vmatmul.bf16.gmra.mxu0 %v337
  %v409 = vpop.f32.mrf.mxu0
  %v410 = vadd.f32 %v285, %v409
  %v411 = vpop.f32.mrf.mxu0
  %v412 = vadd.f32 %v285, %v411
  %413 = vmatmul.bf16.gmra.mxu0 %v340
  %v414 = vpop.f32.mrf.mxu0
  %v415 = vadd.f32 %v285, %v414
  %v416 = vpop.f32.mrf.mxu0
  %v417 = vadd.f32 %v285, %v416
  %418 = vmatmul.bf16.gmra.mxu0 %v343
  %v419 = vpop.f32.mrf.mxu0
  %v420 = vadd.f32 %v285, %v419
  %v421 = vpop.f32.mrf.mxu0
  %v422 = vadd.f32 %v285, %v421
  %423 = vmatmul.bf16.gmra.mxu0 %v346
  %v424 = vpop.f32.mrf.mxu0
  %v425 = vadd.f32 %v285, %v424
  %v426 = vpop.f32.mrf.mxu0
  %v427 = vadd.f32 %v285, %v426
  %428 = vmatmul.bf16.gmra.mxu0 %v349
  %v429 = vpop.f32.mrf.mxu0
  %v430 = vadd.f32 %v285, %v429
  %v431 = vpop.f32.mrf.mxu0
  %v432 = vadd.f32 %v285, %v431
  %433 = vmatmul.bf16.gmra.mxu0 %v352
  %v434 = vpop.f32.mrf.mxu0
  %v435 = vadd.f32 %v285, %v434
  %v436 = vpop.f32.mrf.mxu0
  %v437 = vadd.f32 %v285, %v436
  %438 = vmatmul.bf16.gmra.mxu0 %v355
  %v439 = vpop.f32.mrf.mxu0
  %v440 = vadd.f32 %v285, %v439
  %v441 = vpop.f32.mrf.mxu0
  %v442 = vadd.f32 %v285, %v441
  %443 = vmatmul.bf16.gmra.mxu0 %v358
  %v444 = vpop.f32.mrf.mxu0
  %v445 = vadd.f32 %v285, %v444
  %v446 = vpop.f32.mrf.mxu0
  %v447 = vadd.f32 %v285, %v446
  %448 = vdwg.mxu0
  %v449 = vtanh.pop %v370
  %v450 = vtanh.pop %v372
  %v451 = vtanh.pop %v375
  %v452 = vtanh.pop %v377
  %v453 = vtanh.pop %v380
  %v454 = vtanh.pop %v382
  %v455 = vtanh.pop %v385
  %v456 = vtanh.pop %v387
  %v457 = vtanh.pop %v390
  %v458 = vtanh.pop %v392
  %v459 = vtanh.pop %v395
  %v460 = vtanh.pop %v397
  %v461 = vtanh.pop %v400
  %v462 = vtanh.pop %v402
  %v463 = vtanh.pop %v405
  %v464 = vtanh.pop %v407
  %v465 = vtanh.pop %v410
  %v466 = vtanh.pop %v412
  %v467 = vtanh.pop %v415
  %v468 = vtanh.pop %v417
  %v469 = vtanh.pop %v420
  %v470 = vtanh.pop %v422
  %v471 = vtanh.pop %v425
  %v472 = vtanh.pop %v427
  %v473 = vtanh.pop %v430
  %v474 = vtanh.pop %v432
  %v475 = vtanh.pop %v435
  %v476 = vtanh.pop %v437
  %v477 = vtanh.pop %v440
  %v478 = vtanh.pop %v442
  %v479 = vtanh.pop %v445
  %v480 = vtanh.pop %v447
  %481 = vst.msk [vmem:[%s5] sm:$0xff] %vm89, %v449
  %482 = vst.msk [vmem:[%s5 + $0x8] sm:$0xff] %vm89, %v450
  %483 = vst.msk [vmem:[%s5 + $0x10] sm:$0xff] %vm89, %v451
  %484 = vst.msk [vmem:[%s5 + $0x18] sm:$0xff] %vm89, %v452
  %485 = vst.msk [vmem:[%s5 + $0x20] sm:$0xff] %vm89, %v453
  %486 = vst.msk [vmem:[%s5 + $0x28] sm:$0xff] %vm89, %v454
  %487 = vst.msk [vmem:[%s5 + $0x30] sm:$0xff] %vm89, %v455
  %488 = vst.msk [vmem:[%s5 + $0x38] sm:$0xff] %vm89, %v456
  %489 = vst.msk [vmem:[%s5 + $0x40] sm:$0xff] %vm89, %v457
  %490 = vst.msk [vmem:[%s5 + $0x48] sm:$0xff] %vm89, %v458
  %491 = vst.msk [vmem:[%s5 + $0x50] sm:$0xff] %vm89, %v459
  %492 = vst.msk [vmem:[%s5 + $0x58] sm:$0xff] %vm89, %v460
  %493 = vst.msk [vmem:[%s5 + $0x60] sm:$0xff] %vm89, %v461
  %494 = vst.msk [vmem:[%s5 + $0x68] sm:$0xff] %vm89, %v462
  %495 = vst.msk [vmem:[%s5 + $0x70] sm:$0xff] %vm89, %v463
  %496 = vst.msk [vmem:[%s5 + $0x78] sm:$0xff] %vm89, %v464
  %497 = vst.msk [vmem:[%s5 + $0x80] sm:$0xff] %vm89, %v465
  %498 = vst.msk [vmem:[%s5 + $0x88] sm:$0xff] %vm89, %v466
  %499 = vst.msk [vmem:[%s5 + $0x90] sm:$0xff] %vm89, %v467
  %500 = vst.msk [vmem:[%s5 + $0x98] sm:$0xff] %vm89, %v468
  %501 = vst.msk [vmem:[%s5 + $0xa0] sm:$0xff] %vm89, %v469
  %502 = vst.msk [vmem:[%s5 + $0xa8] sm:$0xff] %vm89, %v470
  %503 = vst.msk [vmem:[%s5 + $0xb0] sm:$0xff] %vm89, %v471
  %504 = vst.msk [vmem:[%s5 + $0xb8] sm:$0xff] %vm89, %v472
  %505 = vst.msk [vmem:[%s5 + $0xc0] sm:$0xff] %vm89, %v473
  %506 = vst.msk [vmem:[%s5 + $0xc8] sm:$0xff] %vm89, %v474
  %507 = vst.msk [vmem:[%s5 + $0xd0] sm:$0xff] %vm89, %v475
  %508 = vst.msk [vmem:[%s5 + $0xd8] sm:$0xff] %vm89, %v476
  %509 = vst.msk [vmem:[%s5 + $0xe0] sm:$0xff] %vm89, %v477
  %510 = vst.msk [vmem:[%s5 + $0xe8] sm:$0xff] %vm89, %v478
  %511 = vst.msk [vmem:[%s5 + $0xf0] sm:$0xff] %vm89, %v479
  %512 = vst.msk [vmem:[%s5 + $0xf8] sm:$0xff] %vm89, %v480
  // Predicated region
  $region22: #{fused_qmlp_forward.1} parent=0 // pred_check
    _
  $region23: #{fused_qmlp_forward.1} parent=0 // pred_check_branch
    %514 = sbr.rel (0) target = $region25
  $region24: #{fused_qmlp_forward.1} parent=0 // pred_region
    _
  $region25: #{fused_qmlp_forward.1} parent=0 // pred_fallthru
    _
  // Predicated region
  $region26: #{fused_qmlp_forward.1} parent=0 // pred_check
    _
  $region27: #{fused_qmlp_forward.1} parent=0 // pred_check_branch
    %516 = sbr.rel (0) target = $region29
  $region28: #{fused_qmlp_forward.1} parent=0 // pred_region
    _
  $region29: #{fused_qmlp_forward.1} parent=0 // pred_fallthru
    _

</llo_original>
